<compile_context>
chip_gen: v5e
topology: v5e:2x2
jax: 0.10.0
libtpu: 0.0.40
codegen_flags: <defaults>
</compile_context>

<pallas_src>
import numpy as np
import jax
import jax.numpy as jnp
from jax.experimental import pallas as pl
from jax.experimental.pallas import tpu as pltpu

# ---------------- problem sizes (small, consistent with the module) ----------
B = 1            # batch (the torch module's bmm only works for batch == 1)
S = 8            # sequence length
D_MODEL = 32     # dim_model
D_INNER = 64     # dim_inner_hidden
H = 4            # qty_head
D_K = 16         # dim_k
D_V = 16         # dim_v
LN_EPS = 1e-5
TEMPER = float(np.power(D_MODEL, 0.5))   # NOTE: sqrt(dim_model), as in the module


# ------------------------- fused Pallas kernel --------------------------------
def encoder_layer_kernel(x_ref, qkv_ref, wproj_ref, bproj_ref, g1_ref, bln1_ref,
                         w1_ref, b1_ref, w2_ref, b2_ref, g2_ref, bln2_ref,
                         out_ref, attn_ref):
    """Whole encoder layer in one kernel.

    x_ref    : (S, D_MODEL)                        input slab
    qkv_ref  : (D_MODEL, H*D_K + H*D_K + H*D_V)    packed [Q | K | V] weights
    wproj_ref: (H*D_V, D_MODEL)                    projection weight, pre-transposed
    w1_ref   : (D_MODEL, D_INNER)                  FFN layer-1 weight, pre-transposed
    w2_ref   : (D_INNER, D_MODEL)                  FFN layer-2 weight, pre-transposed
    out_ref  : (S, D_MODEL)                        encoder-layer output
    attn_ref : (S, H*S)                            lane-dense softmax scores
                                                   (column block h*S:(h+1)*S == head h)
    """
    x = x_ref[...]                                                       # (S, D)

    # One wide MXU push for Q,K,V of every head.
    qkv = jnp.dot(x, qkv_ref[...], preferred_element_type=jnp.float32)   # (S, 192)

    q_off = 0
    k_off = H * D_K
    v_off = 2 * H * D_K

    head_outs = []
    attn_cols = []
    for h in range(H):                                   # static unrolled, H = 4
        q_h = qkv[:, q_off + h * D_K: q_off + (h + 1) * D_K]             # (S, dk)
        k_h = qkv[:, k_off + h * D_K: k_off + (h + 1) * D_K]             # (S, dk)
        v_h = qkv[:, v_off + h * D_V: v_off + (h + 1) * D_V]             # (S, dv)

        # q @ k.T without materializing a transpose.
        s = jax.lax.dot_general(q_h, k_h, (((1,), (1,)), ((), ())),
                                preferred_element_type=jnp.float32) / TEMPER  # (S, S)

        # ScaledDotProductAttention uses nn.Softmax(dim=1): normalize over the
        # *query* axis (axis 0 of the (q_len, k_len) score matrix).
        m = jnp.max(s, axis=0, keepdims=True)
        e = jnp.exp(s - m)
        p_h = e / jnp.sum(e, axis=0, keepdims=True)                      # (S, S)

        attn_cols.append(p_h)
        head_outs.append(jnp.dot(p_h, v_h, preferred_element_type=jnp.float32))

    # Lane-dense attention output: heads concatenated on the lane axis.
    attn_ref[...] = jnp.concatenate(attn_cols, axis=-1)                  # (S, H*S)

    # Head-major concat on the feature axis (== torch.cat(torch.split(...), -1)).
    concat = jnp.concatenate(head_outs, axis=-1)                         # (S, H*D_V)

    # MultiHeadAttention tail: projection + dropout(identity) + residual + LN.
    proj = jnp.dot(concat, wproj_ref[...],
                   preferred_element_type=jnp.float32) + bproj_ref[...]
    y = proj + x
    mu = jnp.mean(y, axis=-1, keepdims=True)
    var = jnp.mean((y - mu) ** 2, axis=-1, keepdims=True)
    ln1 = (y - mu) * jax.lax.rsqrt(var + LN_EPS) * g1_ref[...] + bln1_ref[...]

    # PositionwiseFeedForward: conv1d(k=1) == per-token linear.
    hdn = jnp.dot(ln1, w1_ref[...],
                  preferred_element_type=jnp.float32) + b1_ref[...]
    hdn = jnp.maximum(hdn, 0.0)
    f = jnp.dot(hdn, w2_ref[...],
                preferred_element_type=jnp.float32) + b2_ref[...]
    z = f + ln1
    mu2 = jnp.mean(z, axis=-1, keepdims=True)
    var2 = jnp.mean((z - mu2) ** 2, axis=-1, keepdims=True)
    out_ref[...] = (z - mu2) * jax.lax.rsqrt(var2 + LN_EPS) * g2_ref[...] + bln2_ref[...]


# ----------------------------- wrapper ---------------------------------------
def pack_params(p):
    """Host-side layout plumbing: pack/transposed weights for the fused kernel."""
    qw = jnp.transpose(p["wq"], (1, 0, 2)).reshape(D_MODEL, H * D_K)
    kw = jnp.transpose(p["wk"], (1, 0, 2)).reshape(D_MODEL, H * D_K)
    vw = jnp.transpose(p["wv"], (1, 0, 2)).reshape(D_MODEL, H * D_V)
    return {
        "qkv_w": jnp.concatenate([qw, kw, vw], axis=-1),   # (32, 192)
        "wproj_t": p["wproj"].T,                           # (64, 32)
        "bproj": p["bproj"],
        "ln1_g": p["ln1_g"], "ln1_b": p["ln1_b"],
        "w1_t": p["w1"].T,                                 # (32, 64)
        "b1": p["b1"],
        "w2_t": p["w2"].T,                                 # (64, 32)
        "b2": p["b2"],
        "ln2_g": p["ln2_g"], "ln2_b": p["ln2_b"],
    }


def self_attention_encoder_layer(x, pp):
    """x: (B=1, S, D_MODEL) float32, pp: packed params.

    Returns (output (1, S, D_MODEL), attention (H, S, S))."""
    assert x.shape == (B, S, D_MODEL) and B == 1
    x2 = x[0]                                                           # (S, D)

    vmem = pl.BlockSpec(memory_space=pltpu.MemorySpace.VMEM)
    out, attn_dense = pl.pallas_call(
        encoder_layer_kernel,
        out_shape=(jax.ShapeDtypeStruct((S, D_MODEL), jnp.float32),
                   jax.ShapeDtypeStruct((S, H * S), jnp.float32)),
        in_specs=[vmem] * 12,
        out_specs=(vmem, vmem),
    )(x2, pp["qkv_w"], pp["wproj_t"], pp["bproj"], pp["ln1_g"], pp["ln1_b"],
      pp["w1_t"], pp["b1"], pp["w2_t"], pp["b2"], pp["ln2_g"], pp["ln2_b"])

    # attn_dense[q, h*S + k] == p_h[q, k]  →  (H, S, S)
    attn = jnp.transpose(attn_dense.reshape(S, H, S), (1, 0, 2))
    return out[None], attn


# ----------------------------- pure-JAX reference -----------------------------
def reference(x, p):
    x2 = x[0]
    heads, attns = [], []
    for h in range(H):
        q = x2 @ p["wq"][h]
        k = x2 @ p["wk"][h]
        v = x2 @ p["wv"][h]
        s = (q @ k.T) / TEMPER
        e = jnp.exp(s - jnp.max(s, axis=0, keepdims=True))
        a = e / jnp.sum(e, axis=0, keepdims=True)
        heads.append(a @ v)
        attns.append(a)
    concat = jnp.concatenate(heads, axis=-1)
    y = concat @ p["wproj"].T + p["bproj"] + x2
    mu = jnp.mean(y, -1, keepdims=True)
    var = jnp.mean((y - mu) ** 2, -1, keepdims=True)
    ln1 = (y - mu) / jnp.sqrt(var + LN_EPS) * p["ln1_g"] + p["ln1_b"]
    hdn = jnp.maximum(ln1 @ p["w1"].T + p["b1"], 0.0)
    z = hdn @ p["w2"].T + p["b2"] + ln1
    mu2 = jnp.mean(z, -1, keepdims=True)
    var2 = jnp.mean((z - mu2) ** 2, -1, keepdims=True)
    out = (z - mu2) / jnp.sqrt(var2 + LN_EPS) * p["ln2_g"] + p["ln2_b"]
    return out[None], jnp.stack(attns)


# ----------------------------- params -----------------------------------------
def make_params(key):
    ks = jax.random.split(key, 12)
    xav_qk = np.sqrt(2.0 / (D_MODEL + D_K))
    xav_v = np.sqrt(2.0 / (D_MODEL + D_V))
    f32 = jnp.float32
    return {
        # MultiHeadAttention
        "wq": (jax.random.normal(ks[0], (H, D_MODEL, D_K)) * xav_qk).astype(f32),
        "wk": (jax.random.normal(ks[1], (H, D_MODEL, D_K)) * xav_qk).astype(f32),
        "wv": (jax.random.normal(ks[2], (H, D_MODEL, D_V)) * xav_v).astype(f32),
        "wproj": (jax.random.normal(ks[3], (D_MODEL, H * D_V)) * 0.05).astype(f32),
        "bproj": (jax.random.normal(ks[4], (1, D_MODEL)) * 0.05).astype(f32),
        "ln1_g": (1.0 + 0.1 * jax.random.normal(ks[5], (1, D_MODEL))).astype(f32),
        "ln1_b": (0.1 * jax.random.normal(ks[6], (1, D_MODEL))).astype(f32),
        # PositionwiseFeedForward (Conv1d k=1 weights squeezed to 2-D)
        "w1": (jax.random.normal(ks[7], (D_INNER, D_MODEL)) * 0.05).astype(f32),
        "b1": (jax.random.normal(ks[8], (1, D_INNER)) * 0.05).astype(f32),
        "w2": (jax.random.normal(ks[9], (D_MODEL, D_INNER)) * 0.05).astype(f32),
        "b2": (jax.random.normal(ks[10], (1, D_MODEL)) * 0.05).astype(f32),
        "ln2_g": (1.0 + 0.1 * jax.random.normal(ks[11], (1, D_MODEL))).astype(f32),
        "ln2_b": jnp.zeros((1, D_MODEL), f32),
    }


if __name__ == "__main__":
    key = jax.random.PRNGKey(0)
    k_x, k_p = jax.random.split(key)
    x = jax.random.normal(k_x, (B, S, D_MODEL), dtype=jnp.float32)
    params = make_params(k_p)
    packed = jax.tree_util.tree_map(jax.block_until_ready, pack_params(params))

    out, attn = jax.jit(self_attention_encoder_layer)(x, packed)
    out = jax.block_until_ready(out)
    attn = jax.block_until_ready(attn)

    ref_out, ref_attn = reference(x, params)
    assert out.shape == (B, S, D_MODEL) and attn.shape == (H, S, S)
    np.testing.assert_allclose(np.asarray(out), np.asarray(ref_out), rtol=2e-4, atol=2e-4)
    np.testing.assert_allclose(np.asarray(attn), np.asarray(ref_attn), rtol=2e-4, atol=2e-4)

    print("KERNEL_OK")
</pallas_src>

<mosaic_0001>
module attributes {stable_mosaic.version = 11 : i64} {
  func.func @encoder_layer_kernel(%arg0: memref<8x32xf32, #tpu.memory_space<vmem>>, %arg1: memref<32x192xf32, #tpu.memory_space<vmem>>, %arg2: memref<64x32xf32, #tpu.memory_space<vmem>>, %arg3: memref<1x32xf32, #tpu.memory_space<vmem>>, %arg4: memref<1x32xf32, #tpu.memory_space<vmem>>, %arg5: memref<1x32xf32, #tpu.memory_space<vmem>>, %arg6: memref<32x64xf32, #tpu.memory_space<vmem>>, %arg7: memref<1x64xf32, #tpu.memory_space<vmem>>, %arg8: memref<64x32xf32, #tpu.memory_space<vmem>>, %arg9: memref<1x32xf32, #tpu.memory_space<vmem>>, %arg10: memref<1x32xf32, #tpu.memory_space<vmem>>, %arg11: memref<1x32xf32, #tpu.memory_space<vmem>>, %arg12: memref<8x32xf32, #tpu.memory_space<vmem>>, %arg13: memref<8x32xf32, #tpu.memory_space<vmem>>) attributes {dimension_semantics = [], scalar_prefetch = 0 : i64, scratch_operands = 0 : i64, tpu.core_type = #tpu.core_type<tc>} {
    %c0 = arith.constant 0 : index
    %c0_0 = arith.constant 0 : index
    %0 = vector.load %arg0[%c0, %c0_0] : memref<8x32xf32, #tpu.memory_space<vmem>>, vector<8x32xf32>
    %c0_1 = arith.constant 0 : index
    %c0_2 = arith.constant 0 : index
    %1 = vector.load %arg1[%c0_1, %c0_2] : memref<32x192xf32, #tpu.memory_space<vmem>>, vector<32x192xf32>
    %cst = arith.constant dense<0.000000e+00> : vector<8x192xf32>
    %2 = tpu.matmul %0, %1, %cst {dimension_numbers = #tpu.dot_dimension_numbers<[1], [0], [0], [1], [0, 0, 1, 1], [], []>} : vector<8x32xf32>, vector<32x192xf32>, vector<8x192xf32> -> vector<8x192xf32>
    %3 = vector.extract_strided_slice %2 {offsets = [0, 0], sizes = [8, 16], strides = [1, 1]} : vector<8x192xf32> to vector<8x16xf32>
    %4 = vector.extract_strided_slice %2 {offsets = [0, 64], sizes = [8, 16], strides = [1, 1]} : vector<8x192xf32> to vector<8x16xf32>
    %5 = vector.extract_strided_slice %2 {offsets = [0, 128], sizes = [8, 16], strides = [1, 1]} : vector<8x192xf32> to vector<8x16xf32>
    %cst_3 = arith.constant dense<0.000000e+00> : vector<8x8xf32>
    %6 = tpu.matmul %3, %4, %cst_3 {dimension_numbers = #tpu.dot_dimension_numbers<[1], [1], [0], [0], [0, 0, 1, 0], [], []>} : vector<8x16xf32>, vector<8x16xf32>, vector<8x8xf32> -> vector<8x8xf32>
    %cst_4 = arith.constant 5.65685415 : f32
    %7 = vector.broadcast %cst_4 : f32 to vector<8x8xf32>
    %8 = arith.divf %6, %7 : vector<8x8xf32>
    %cst_5 = arith.constant dense<0xFF800000> : vector<8xf32>
    %9 = vector.multi_reduction <maximumf>, %8, %cst_5 [0] : vector<8x8xf32> to vector<8xf32>
    %10 = vector.shape_cast %9 : vector<8xf32> to vector<1x8xf32>
    %11 = vector.broadcast %10 : vector<1x8xf32> to vector<8x8xf32>
    %12 = arith.subf %8, %11 : vector<8x8xf32>
    %13 = math.exp %12 : vector<8x8xf32>
    %cst_6 = arith.constant dense<0.000000e+00> : vector<8xf32>
    %14 = vector.multi_reduction <add>, %13, %cst_6 [0] : vector<8x8xf32> to vector<8xf32>
    %15 = vector.shape_cast %14 : vector<8xf32> to vector<1x8xf32>
    %16 = vector.broadcast %15 : vector<1x8xf32> to vector<8x8xf32>
    %17 = arith.divf %13, %16 : vector<8x8xf32>
    %cst_7 = arith.constant dense<0.000000e+00> : vector<8x16xf32>
    %18 = tpu.matmul %17, %5, %cst_7 {dimension_numbers = #tpu.dot_dimension_numbers<[1], [0], [0], [1], [0, 0, 1, 1], [], []>} : vector<8x8xf32>, vector<8x16xf32>, vector<8x16xf32> -> vector<8x16xf32>
    %19 = vector.extract_strided_slice %2 {offsets = [0, 16], sizes = [8, 16], strides = [1, 1]} : vector<8x192xf32> to vector<8x16xf32>
    %20 = vector.extract_strided_slice %2 {offsets = [0, 80], sizes = [8, 16], strides = [1, 1]} : vector<8x192xf32> to vector<8x16xf32>
    %21 = vector.extract_strided_slice %2 {offsets = [0, 144], sizes = [8, 16], strides = [1, 1]} : vector<8x192xf32> to vector<8x16xf32>
    %cst_8 = arith.constant dense<0.000000e+00> : vector<8x8xf32>
    %22 = tpu.matmul %19, %20, %cst_8 {dimension_numbers = #tpu.dot_dimension_numbers<[1], [1], [0], [0], [0, 0, 1, 0], [], []>} : vector<8x16xf32>, vector<8x16xf32>, vector<8x8xf32> -> vector<8x8xf32>
    %cst_9 = arith.constant 5.65685415 : f32
    %23 = vector.broadcast %cst_9 : f32 to vector<8x8xf32>
    %24 = arith.divf %22, %23 : vector<8x8xf32>
    %cst_10 = arith.constant dense<0xFF800000> : vector<8xf32>
    %25 = vector.multi_reduction <maximumf>, %24, %cst_10 [0] : vector<8x8xf32> to vector<8xf32>
    %26 = vector.shape_cast %25 : vector<8xf32> to vector<1x8xf32>
    %27 = vector.broadcast %26 : vector<1x8xf32> to vector<8x8xf32>
    %28 = arith.subf %24, %27 : vector<8x8xf32>
    %29 = math.exp %28 : vector<8x8xf32>
    %cst_11 = arith.constant dense<0.000000e+00> : vector<8xf32>
    %30 = vector.multi_reduction <add>, %29, %cst_11 [0] : vector<8x8xf32> to vector<8xf32>
    %31 = vector.shape_cast %30 : vector<8xf32> to vector<1x8xf32>
    %32 = vector.broadcast %31 : vector<1x8xf32> to vector<8x8xf32>
    %33 = arith.divf %29, %32 : vector<8x8xf32>
    %cst_12 = arith.constant dense<0.000000e+00> : vector<8x16xf32>
    %34 = tpu.matmul %33, %21, %cst_12 {dimension_numbers = #tpu.dot_dimension_numbers<[1], [0], [0], [1], [0, 0, 1, 1], [], []>} : vector<8x8xf32>, vector<8x16xf32>, vector<8x16xf32> -> vector<8x16xf32>
    %35 = vector.extract_strided_slice %2 {offsets = [0, 32], sizes = [8, 16], strides = [1, 1]} : vector<8x192xf32> to vector<8x16xf32>
    %36 = vector.extract_strided_slice %2 {offsets = [0, 96], sizes = [8, 16], strides = [1, 1]} : vector<8x192xf32> to vector<8x16xf32>
    %37 = vector.extract_strided_slice %2 {offsets = [0, 160], sizes = [8, 16], strides = [1, 1]} : vector<8x192xf32> to vector<8x16xf32>
    %cst_13 = arith.constant dense<0.000000e+00> : vector<8x8xf32>
    %38 = tpu.matmul %35, %36, %cst_13 {dimension_numbers = #tpu.dot_dimension_numbers<[1], [1], [0], [0], [0, 0, 1, 0], [], []>} : vector<8x16xf32>, vector<8x16xf32>, vector<8x8xf32> -> vector<8x8xf32>
    %cst_14 = arith.constant 5.65685415 : f32
    %39 = vector.broadcast %cst_14 : f32 to vector<8x8xf32>
    %40 = arith.divf %38, %39 : vector<8x8xf32>
    %cst_15 = arith.constant dense<0xFF800000> : vector<8xf32>
    %41 = vector.multi_reduction <maximumf>, %40, %cst_15 [0] : vector<8x8xf32> to vector<8xf32>
    %42 = vector.shape_cast %41 : vector<8xf32> to vector<1x8xf32>
    %43 = vector.broadcast %42 : vector<1x8xf32> to vector<8x8xf32>
    %44 = arith.subf %40, %43 : vector<8x8xf32>
    %45 = math.exp %44 : vector<8x8xf32>
    %cst_16 = arith.constant dense<0.000000e+00> : vector<8xf32>
    %46 = vector.multi_reduction <add>, %45, %cst_16 [0] : vector<8x8xf32> to vector<8xf32>
    %47 = vector.shape_cast %46 : vector<8xf32> to vector<1x8xf32>
    %48 = vector.broadcast %47 : vector<1x8xf32> to vector<8x8xf32>
    %49 = arith.divf %45, %48 : vector<8x8xf32>
    %cst_17 = arith.constant dense<0.000000e+00> : vector<8x16xf32>
    %50 = tpu.matmul %49, %37, %cst_17 {dimension_numbers = #tpu.dot_dimension_numbers<[1], [0], [0], [1], [0, 0, 1, 1], [], []>} : vector<8x8xf32>, vector<8x16xf32>, vector<8x16xf32> -> vector<8x16xf32>
    %51 = vector.extract_strided_slice %2 {offsets = [0, 48], sizes = [8, 16], strides = [1, 1]} : vector<8x192xf32> to vector<8x16xf32>
    %52 = vector.extract_strided_slice %2 {offsets = [0, 112], sizes = [8, 16], strides = [1, 1]} : vector<8x192xf32> to vector<8x16xf32>
    %53 = vector.extract_strided_slice %2 {offsets = [0, 176], sizes = [8, 16], strides = [1, 1]} : vector<8x192xf32> to vector<8x16xf32>
    %cst_18 = arith.constant dense<0.000000e+00> : vector<8x8xf32>
    %54 = tpu.matmul %51, %52, %cst_18 {dimension_numbers = #tpu.dot_dimension_numbers<[1], [1], [0], [0], [0, 0, 1, 0], [], []>} : vector<8x16xf32>, vector<8x16xf32>, vector<8x8xf32> -> vector<8x8xf32>
    %cst_19 = arith.constant 5.65685415 : f32
    %55 = vector.broadcast %cst_19 : f32 to vector<8x8xf32>
    %56 = arith.divf %54, %55 : vector<8x8xf32>
    %cst_20 = arith.constant dense<0xFF800000> : vector<8xf32>
    %57 = vector.multi_reduction <maximumf>, %56, %cst_20 [0] : vector<8x8xf32> to vector<8xf32>
    %58 = vector.shape_cast %57 : vector<8xf32> to vector<1x8xf32>
    %59 = vector.broadcast %58 : vector<1x8xf32> to vector<8x8xf32>
    %60 = arith.subf %56, %59 : vector<8x8xf32>
    %61 = math.exp %60 : vector<8x8xf32>
    %cst_21 = arith.constant dense<0.000000e+00> : vector<8xf32>
    %62 = vector.multi_reduction <add>, %61, %cst_21 [0] : vector<8x8xf32> to vector<8xf32>
    %63 = vector.shape_cast %62 : vector<8xf32> to vector<1x8xf32>
    %64 = vector.broadcast %63 : vector<1x8xf32> to vector<8x8xf32>
    %65 = arith.divf %61, %64 : vector<8x8xf32>
    %cst_22 = arith.constant dense<0.000000e+00> : vector<8x16xf32>
    %66 = tpu.matmul %65, %53, %cst_22 {dimension_numbers = #tpu.dot_dimension_numbers<[1], [0], [0], [1], [0, 0, 1, 1], [], []>} : vector<8x8xf32>, vector<8x16xf32>, vector<8x16xf32> -> vector<8x16xf32>
    %67 = tpu.concatenate %17, %33, %49, %65 in 1 : vector<8x8xf32>, vector<8x8xf32>, vector<8x8xf32>, vector<8x8xf32> -> vector<8x32xf32>
    %c0_23 = arith.constant 0 : index
    %c0_24 = arith.constant 0 : index
    %68 = vector.load %arg13[%c0_23, %c0_24] : memref<8x32xf32, #tpu.memory_space<vmem>>, vector<8x32xf32>
    tpu.vector_store %arg13[%c0_23, %c0_24], %67 {strides = array<i32>} : memref<8x32xf32, #tpu.memory_space<vmem>>, vector<8x32xf32>,
    %69 = tpu.concatenate %18, %34, %50, %66 in 1 : vector<8x16xf32>, vector<8x16xf32>, vector<8x16xf32>, vector<8x16xf32> -> vector<8x64xf32>
    %c0_25 = arith.constant 0 : index
    %c0_26 = arith.constant 0 : index
    %70 = vector.load %arg2[%c0_25, %c0_26] : memref<64x32xf32, #tpu.memory_space<vmem>>, vector<64x32xf32>
    %cst_27 = arith.constant dense<0.000000e+00> : vector<8x32xf32>
    %71 = tpu.matmul %69, %70, %cst_27 {dimension_numbers = #tpu.dot_dimension_numbers<[1], [0], [0], [1], [0, 0, 1, 1], [], []>} : vector<8x64xf32>, vector<64x32xf32>, vector<8x32xf32> -> vector<8x32xf32>
    %c0_28 = arith.constant 0 : index
    %c0_29 = arith.constant 0 : index
    %72 = vector.load %arg3[%c0_28, %c0_29] : memref<1x32xf32, #tpu.memory_space<vmem>>, vector<1x32xf32>
    %73 = vector.broadcast %72 : vector<1x32xf32> to vector<8x32xf32>
    %74 = arith.addf %71, %73 : vector<8x32xf32>
    %75 = arith.addf %74, %0 : vector<8x32xf32>
    %cst_30 = arith.constant dense<0.000000e+00> : vector<8xf32>
    %76 = vector.multi_reduction <add>, %75, %cst_30 [1] : vector<8x32xf32> to vector<8xf32>
    %77 = vector.shape_cast %76 : vector<8xf32> to vector<8x1xf32>
    %cst_31 = arith.constant 3.200000e+01 : f32
    %78 = vector.broadcast %cst_31 : f32 to vector<8x1xf32>
    %79 = arith.divf %77, %78 : vector<8x1xf32>
    %80 = vector.broadcast %79 : vector<8x1xf32> to vector<8x32xf32>
    %81 = arith.subf %75, %80 : vector<8x32xf32>
    %82 = arith.mulf %81, %81 : vector<8x32xf32>
    %cst_32 = arith.constant dense<0.000000e+00> : vector<8xf32>
    %83 = vector.multi_reduction <add>, %82, %cst_32 [1] : vector<8x32xf32> to vector<8xf32>
    %84 = vector.shape_cast %83 : vector<8xf32> to vector<8x1xf32>
    %cst_33 = arith.constant 3.200000e+01 : f32
    %85 = vector.broadcast %cst_33 : f32 to vector<8x1xf32>
    %86 = arith.divf %84, %85 : vector<8x1xf32>
    %87 = vector.broadcast %79 : vector<8x1xf32> to vector<8x32xf32>
    %88 = arith.subf %75, %87 : vector<8x32xf32>
    %cst_34 = arith.constant 9.99999974E-6 : f32
    %89 = vector.broadcast %cst_34 : f32 to vector<8x1xf32>
    %90 = arith.addf %86, %89 : vector<8x1xf32>
    %91 = math.rsqrt %90 : vector<8x1xf32>
    %92 = vector.broadcast %91 : vector<8x1xf32> to vector<8x32xf32>
    %93 = arith.mulf %88, %92 : vector<8x32xf32>
    %c0_35 = arith.constant 0 : index
    %c0_36 = arith.constant 0 : index
    %94 = vector.load %arg4[%c0_35, %c0_36] : memref<1x32xf32, #tpu.memory_space<vmem>>, vector<1x32xf32>
    %95 = vector.broadcast %94 : vector<1x32xf32> to vector<8x32xf32>
    %96 = arith.mulf %93, %95 : vector<8x32xf32>
    %c0_37 = arith.constant 0 : index
    %c0_38 = arith.constant 0 : index
    %97 = vector.load %arg5[%c0_37, %c0_38] : memref<1x32xf32, #tpu.memory_space<vmem>>, vector<1x32xf32>
    %98 = vector.broadcast %97 : vector<1x32xf32> to vector<8x32xf32>
    %99 = arith.addf %96, %98 : vector<8x32xf32>
    %c0_39 = arith.constant 0 : index
    %c0_40 = arith.constant 0 : index
    %100 = vector.load %arg6[%c0_39, %c0_40] : memref<32x64xf32, #tpu.memory_space<vmem>>, vector<32x64xf32>
    %cst_41 = arith.constant dense<0.000000e+00> : vector<8x64xf32>
    %101 = tpu.matmul %99, %100, %cst_41 {dimension_numbers = #tpu.dot_dimension_numbers<[1], [0], [0], [1], [0, 0, 1, 1], [], []>} : vector<8x32xf32>, vector<32x64xf32>, vector<8x64xf32> -> vector<8x64xf32>
    %c0_42 = arith.constant 0 : index
    %c0_43 = arith.constant 0 : index
    %102 = vector.load %arg7[%c0_42, %c0_43] : memref<1x64xf32, #tpu.memory_space<vmem>>, vector<1x64xf32>
    %103 = vector.broadcast %102 : vector<1x64xf32> to vector<8x64xf32>
    %104 = arith.addf %101, %103 : vector<8x64xf32>
    %cst_44 = arith.constant 0.000000e+00 : f32
    %105 = vector.broadcast %cst_44 : f32 to vector<8x64xf32>
    %106 = arith.maximumf %104, %105 : vector<8x64xf32>
    %c0_45 = arith.constant 0 : index
    %c0_46 = arith.constant 0 : index
    %107 = vector.load %arg8[%c0_45, %c0_46] : memref<64x32xf32, #tpu.memory_space<vmem>>, vector<64x32xf32>
    %cst_47 = arith.constant dense<0.000000e+00> : vector<8x32xf32>
    %108 = tpu.matmul %106, %107, %cst_47 {dimension_numbers = #tpu.dot_dimension_numbers<[1], [0], [0], [1], [0, 0, 1, 1], [], []>} : vector<8x64xf32>, vector<64x32xf32>, vector<8x32xf32> -> vector<8x32xf32>
    %c0_48 = arith.constant 0 : index
    %c0_49 = arith.constant 0 : index
    %109 = vector.load %arg9[%c0_48, %c0_49] : memref<1x32xf32, #tpu.memory_space<vmem>>, vector<1x32xf32>
    %110 = vector.broadcast %109 : vector<1x32xf32> to vector<8x32xf32>
    %111 = arith.addf %108, %110 : vector<8x32xf32>
    %112 = arith.addf %111, %99 : vector<8x32xf32>
    %cst_50 = arith.constant dense<0.000000e+00> : vector<8xf32>
    %113 = vector.multi_reduction <add>, %112, %cst_50 [1] : vector<8x32xf32> to vector<8xf32>
    %114 = vector.shape_cast %113 : vector<8xf32> to vector<8x1xf32>
    %cst_51 = arith.constant 3.200000e+01 : f32
    %115 = vector.broadcast %cst_51 : f32 to vector<8x1xf32>
    %116 = arith.divf %114, %115 : vector<8x1xf32>
    %117 = vector.broadcast %116 : vector<8x1xf32> to vector<8x32xf32>
    %118 = arith.subf %112, %117 : vector<8x32xf32>
    %119 = arith.mulf %118, %118 : vector<8x32xf32>
    %cst_52 = arith.constant dense<0.000000e+00> : vector<8xf32>
    %120 = vector.multi_reduction <add>, %119, %cst_52 [1] : vector<8x32xf32> to vector<8xf32>
    %121 = vector.shape_cast %120 : vector<8xf32> to vector<8x1xf32>
    %cst_53 = arith.constant 3.200000e+01 : f32
    %122 = vector.broadcast %cst_53 : f32 to vector<8x1xf32>
    %123 = arith.divf %121, %122 : vector<8x1xf32>
    %124 = vector.broadcast %116 : vector<8x1xf32> to vector<8x32xf32>
    %125 = arith.subf %112, %124 : vector<8x32xf32>
    %cst_54 = arith.constant 9.99999974E-6 : f32
    %126 = vector.broadcast %cst_54 : f32 to vector<8x1xf32>
    %127 = arith.addf %123, %126 : vector<8x1xf32>
    %128 = math.rsqrt %127 : vector<8x1xf32>
    %129 = vector.broadcast %128 : vector<8x1xf32> to vector<8x32xf32>
    %130 = arith.mulf %125, %129 : vector<8x32xf32>
    %c0_55 = arith.constant 0 : index
    %c0_56 = arith.constant 0 : index
    %131 = vector.load %arg10[%c0_55, %c0_56] : memref<1x32xf32, #tpu.memory_space<vmem>>, vector<1x32xf32>
    %132 = vector.broadcast %131 : vector<1x32xf32> to vector<8x32xf32>
    %133 = arith.mulf %130, %132 : vector<8x32xf32>
    %c0_57 = arith.constant 0 : index
    %c0_58 = arith.constant 0 : index
    %134 = vector.load %arg11[%c0_57, %c0_58] : memref<1x32xf32, #tpu.memory_space<vmem>>, vector<1x32xf32>
    %135 = vector.broadcast %134 : vector<1x32xf32> to vector<8x32xf32>
    %136 = arith.addf %133, %135 : vector<8x32xf32>
    %c0_59 = arith.constant 0 : index
    %c0_60 = arith.constant 0 : index
    %137 = vector.load %arg12[%c0_59, %c0_60] : memref<8x32xf32, #tpu.memory_space<vmem>>, vector<8x32xf32>
    tpu.vector_store %arg12[%c0_59, %c0_60], %136 {strides = array<i32>} : memref<8x32xf32, #tpu.memory_space<vmem>>, vector<8x32xf32>,
    return
  }
}

</mosaic_0001>

<llo_original>
// kernel: self_attention_encoder_layer.1
$region0: #{self_attention_encoder_layer.1}
  #allocation0 [shape = 'u32[]', space=smem, size = 0x4, offset = 0x4, fixed_abs, tag = 'smem constant byte address 0x4 - core index']
  #allocation1 [shape = 'u32[72,128]{1,0:T(1,128)}', space=vmem, size = 0x9000, scoped, tag = 'internal scratch']
  %s0 = inlined_call_operand.vmem [shape: f32[8,32], index: 0, kind: input, shape index: {}]
  %s1 = inlined_call_operand.vmem [shape: f32[32,192], index: 1, kind: input, shape index: {}]
  %s2 = inlined_call_operand.vmem [shape: f32[64,32], index: 2, kind: input, shape index: {}]
  %s3 = inlined_call_operand.vmem [shape: f32[1,32], index: 3, kind: input, shape index: {}]
  %s4 = inlined_call_operand.vmem [shape: f32[1,32], index: 4, kind: input, shape index: {}]
  %s5 = inlined_call_operand.vmem [shape: f32[1,32], index: 5, kind: input, shape index: {}]
  %s6 = inlined_call_operand.vmem [shape: f32[32,64], index: 6, kind: input, shape index: {}]
  %s7 = inlined_call_operand.vmem [shape: f32[1,64], index: 7, kind: input, shape index: {}]
  %s8 = inlined_call_operand.vmem [shape: f32[64,32], index: 8, kind: input, shape index: {}]
  %s9 = inlined_call_operand.vmem [shape: f32[1,32], index: 9, kind: input, shape index: {}]
  %s10 = inlined_call_operand.vmem [shape: f32[1,32], index: 10, kind: input, shape index: {}]
  %s11 = inlined_call_operand.vmem [shape: f32[1,32], index: 11, kind: input, shape index: {}]
  %s12 = inlined_call_operand.hbm [shape: f32[8,32], index: 12, kind: output, shape index: {0}]
  %s13 = inlined_call_operand.vmem [shape: f32[8,32], index: 13, kind: output, shape index: {1}]
  %14 = xla_tuple %s12, %s13
  %s15 = sld [smem:[#allocation0]]
  $region66: #{self_attention_encoder_layer.1} parent=0
    _
  %s17 = ssub.s32 1, %s15
  %s18 = scalar_select 0, %s17, %s15
  $region1: #{self_attention_encoder_layer.1} parent=0
    #allocation2 [shape = 'u8[4096]{0}', space=vmem, size = 0x1000, scoped, tag = 'output window, operand 0, single buffered']
    #allocation3 [shape = 's32[1]{0}', space=sflag, size = 0x4, scoped, tag = 'scoped memory for self_attention_encoder_layer.1']
    %19 = vsyncpa [#allocation3], 0
    // Predicated region
    $region2: #{self_attention_encoder_layer.1} parent=1 // pred_check
      _
    $region3: #{self_attention_encoder_layer.1} parent=1 // pred_check_branch
      %21 = sbr.rel (0) target = $region5
    $region4: #{self_attention_encoder_layer.1} parent=1 // pred_region
      _
    $region5: #{self_attention_encoder_layer.1} parent=1 // pred_fallthru
      _
    // Predicated region
    $region6: #{self_attention_encoder_layer.1} parent=1 // pred_check
      _
    $region7: #{self_attention_encoder_layer.1} parent=1 // pred_check_branch
      %23 = sbr.rel (0) target = $region9
    $region8: #{self_attention_encoder_layer.1} parent=1 // pred_region
      _
    $region9: #{self_attention_encoder_layer.1} parent=1 // pred_fallthru
      _
    // Predicated region
    $region10: #{self_attention_encoder_layer.1} parent=1 // pred_check
      _
    $region11: #{self_attention_encoder_layer.1} parent=1 // pred_check_branch
      %25 = sbr.rel (0) target = $region13
    $region12: #{self_attention_encoder_layer.1} parent=1 // pred_region
      _
    $region13: #{self_attention_encoder_layer.1} parent=1 // pred_fallthru
      _
    // Predicated region
    $region14: #{self_attention_encoder_layer.1} parent=1 // pred_check
      _
    $region15: #{self_attention_encoder_layer.1} parent=1 // pred_check_branch
      %27 = sbr.rel (0) target = $region17
    $region16: #{self_attention_encoder_layer.1} parent=1 // pred_region
      _
    $region17: #{self_attention_encoder_layer.1} parent=1 // pred_fallthru
      _
    // Predicated region
    $region18: #{self_attention_encoder_layer.1} parent=1 // pred_check
      _
    $region19: #{self_attention_encoder_layer.1} parent=1 // pred_check_branch
      %29 = sbr.rel (0) target = $region21
    $region20: #{self_attention_encoder_layer.1} parent=1 // pred_region
      _
    $region21: #{self_attention_encoder_layer.1} parent=1 // pred_fallthru
      _
    // Predicated region
    $region22: #{self_attention_encoder_layer.1} parent=1 // pred_check
      _
    $region23: #{self_attention_encoder_layer.1} parent=1 // pred_check_branch
      %31 = sbr.rel (0) target = $region25
    $region24: #{self_attention_encoder_layer.1} parent=1 // pred_region
      _
    $region25: #{self_attention_encoder_layer.1} parent=1 // pred_fallthru
      _
    // Predicated region
    $region26: #{self_attention_encoder_layer.1} parent=1 // pred_check
      _
    $region27: #{self_attention_encoder_layer.1} parent=1 // pred_check_branch
      %33 = sbr.rel (0) target = $region29
    $region28: #{self_attention_encoder_layer.1} parent=1 // pred_region
      _
    $region29: #{self_attention_encoder_layer.1} parent=1 // pred_fallthru
      _
    // Predicated region
    $region30: #{self_attention_encoder_layer.1} parent=1 // pred_check
      _
    $region31: #{self_attention_encoder_layer.1} parent=1 // pred_check_branch
      %35 = sbr.rel (0) target = $region33
    $region32: #{self_attention_encoder_layer.1} parent=1 // pred_region
      _
    $region33: #{self_attention_encoder_layer.1} parent=1 // pred_fallthru
      _
    // Predicated region
    $region34: #{self_attention_encoder_layer.1} parent=1 // pred_check
      _
    $region35: #{self_attention_encoder_layer.1} parent=1 // pred_check_branch
      %37 = sbr.rel (0) target = $region37
    $region36: #{self_attention_encoder_layer.1} parent=1 // pred_region
      _
    $region37: #{self_attention_encoder_layer.1} parent=1 // pred_fallthru
      _
    // Predicated region
    $region38: #{self_attention_encoder_layer.1} parent=1 // pred_check
      _
    $region39: #{self_attention_encoder_layer.1} parent=1 // pred_check_branch
      %39 = sbr.rel (0) target = $region41
    $region40: #{self_attention_encoder_layer.1} parent=1 // pred_region
      _
    $region41: #{self_attention_encoder_layer.1} parent=1 // pred_fallthru
      _
    // Predicated region
    $region42: #{self_attention_encoder_layer.1} parent=1 // pred_check
      _
    $region43: #{self_attention_encoder_layer.1} parent=1 // pred_check_branch
      %41 = sbr.rel (0) target = $region45
    $region44: #{self_attention_encoder_layer.1} parent=1 // pred_region
      _
    $region45: #{self_attention_encoder_layer.1} parent=1 // pred_fallthru
      _
    // Predicated region
    $region46: #{self_attention_encoder_layer.1} parent=1 // pred_check
      _
    $region47: #{self_attention_encoder_layer.1} parent=1 // pred_check_branch
      %43 = sbr.rel (0) target = $region49
    $region48: #{self_attention_encoder_layer.1} parent=1 // pred_region
      _
    $region49: #{self_attention_encoder_layer.1} parent=1 // pred_fallthru
      _
    %v44 = vld [vmem:[%s0] sm:$0xff]
    %v45 = vld [vmem:[%s1] sm:$0xff]
    %v46 = vld [vmem:[%s1 + $0x8] sm:$0xff]
    %v47 = vld [vmem:[%s1 + $0x10] sm:$0xff]
    %v48 = vld [vmem:[%s1 + $0x18] sm:$0xff]
    %v49 = vld [vmem:[%s1 + $0x20] sm:$0xff]
    %v50 = vld [vmem:[%s1 + $0x28] sm:$0xff]
    %v51 = vld [vmem:[%s1 + $0x30] sm:$0xff]
    %v52 = vld [vmem:[%s1 + $0x38] sm:$0xff]
    %vm53 = vcmask 261120
    %v55 = vsel %vm53, %v44, 0
    %57 = vmatpush.msra.mxu0 0.0
    %58 = vmatpush.msra.mxu0 0.0
    %59 = vmatpush.msra.mxu0 0.0
    %60 = vmatpush.msra.mxu0 0.0
    %61 = vmatpush.msra.mxu0 0.0
    %62 = vmatpush.msra.mxu0 0.0
    %63 = vmatpush.msra.mxu0 0.0
    %64 = vmatpush.msra.mxu0 0.0
    %65 = vmatpush.msra.mxu0 0.0
    %66 = vmatpush.msra.mxu0 0.0
    %67 = vmatpush.msra.mxu0 0.0
    %68 = vmatpush.msra.mxu0 0.0
    %69 = vmatpush.msra.mxu0 %v51
    %70 = vmatpush.msra.mxu0 %v49
    %71 = vmatpush.msra.mxu0 %v47
    %72 = vmatpush.msra.mxu0 %v45
    %73 = vmatmul.f32.gmra.mxu0 %v55
    %v74 = vpop.f32.mrf.mxu0
    %v75 = vadd.f32 0.0, %v74
    %76 = vdwg.mxu0
    %77 = vmatpush.msra.mxu0 0.0
    %78 = vmatpush.msra.mxu0 0.0
    %79 = vmatpush.msra.mxu0 0.0
    %80 = vmatpush.msra.mxu0 0.0
    %81 = vmatpush.msra.mxu0 0.0
    %82 = vmatpush.msra.mxu0 0.0
    %83 = vmatpush.msra.mxu0 0.0
    %84 = vmatpush.msra.mxu0 0.0
    %85 = vmatpush.msra.mxu0 0.0
    %86 = vmatpush.msra.mxu0 0.0
    %87 = vmatpush.msra.mxu0 0.0
    %88 = vmatpush.msra.mxu0 0.0
    %89 = vmatpush.msra.mxu0 %v52
    %90 = vmatpush.msra.mxu0 %v50
    %91 = vmatpush.msra.mxu0 %v48
    %92 = vmatpush.msra.mxu0 %v46
    %93 = vmatmul.f32.gmra.mxu0 %v55
    %v94 = vpop.f32.mrf.mxu0
    %v95 = vadd.f32 0.0, %v94
    %96 = vdwg.mxu0
    %98 = vrot.lane.b32.xlu0 %v75, 64
    %v99 = vpop.permute.xlu0 %98
    %vm100 = vcmask 130048
    %v101 = vsel %vm100, %v75, 0
    %v103 = vsel %vm100, %v99, 0
    %105 = vmatpush.xpose.msra.mxu0 0.0
    %106 = vmatpush.xpose.msra.mxu0 0.0
    %107 = vmatpush.xpose.msra.mxu0 0.0
    %108 = vmatpush.xpose.msra.mxu0 0.0
    %109 = vmatpush.xpose.msra.mxu0 0.0
    %110 = vmatpush.xpose.msra.mxu0 0.0
    %111 = vmatpush.xpose.msra.mxu0 0.0
    %112 = vmatpush.xpose.msra.mxu0 0.0
    %113 = vmatpush.xpose.msra.mxu0 0.0
    %114 = vmatpush.xpose.msra.mxu0 0.0
    %115 = vmatpush.xpose.msra.mxu0 0.0
    %116 = vmatpush.xpose.msra.mxu0 0.0
    %117 = vmatpush.xpose.msra.mxu0 0.0
    %118 = vmatpush.xpose.msra.mxu0 0.0
    %119 = vmatpush.xpose.msra.mxu0 0.0
    %120 = vmatpush.xpose.msra.mxu0 %v103
    %121 = vmatmul.f32.gmra.mxu0 %v101
    %v122 = vpop.f32.mrf.mxu0
    %v123 = vadd.f32 0.0, %v122
    %124 = vdwg.mxu0
    %v125 = vrcp.pop 5.656854
    %v126 = vmul.f32 5.656854, %v125
    %v127 = vsub.f32 1.0, %v126
    %v128 = vmul.f32 %v125, %v127
    %v129 = vadd.f32 %v125, %v128
    %vm130 = vweird.f32 %v125
    %v131 = vsel %vm130, %v125, %v129
    %v132 = vmul.f32 %v123, %v131
    %vm133 = vcmask 64512
    %v134 = vsel %vm133, %v132, -inf
    %v135 = vrot.slane %v134, 4
    %v136 = vmax.f32 %v134, %v135
    %v137 = vrot.slane %v136, 2
    %v138 = vmax.f32 %v136, %v137
    %v139 = vrot.slane %v138, 1
    %v140 = vmax.f32 %v138, %v139
    %v141 = vsub.f32 %v132, %v140
    %v142 = vmul.f32 %v141, 1.442695
    %v143 = vpow.pop %v142
    %v144 = vsel %vm133, %v143, 0.0
    %v145 = vrot.slane %v144, 4
    %v146 = vadd.f32 %v144, %v145
    %v147 = vrot.slane %v146, 2
    %v148 = vadd.f32 %v146, %v147
    %v149 = vrot.slane %v148, 1
    %v150 = vadd.f32 %v148, %v149
    %v151 = vrcp.pop %v150
    %v152 = vmul.f32 %v150, %v151
    %v153 = vsub.f32 1.0, %v152
    %v154 = vmul.f32 %v151, %v153
    %v155 = vadd.f32 %v151, %v154
    %vm156 = vweird.f32 %v150
    %vm157 = vweird.f32 %v151
    %vm158 = vmor %vm156, %vm157
    %v159 = vsel %vm158, %v151, %v155
    %v160 = vand.u32 2147483647, %v150
    %vm161 = vcmp.eq.f32.partialorder %v160, 8.507059e+37
    %v162 = vand.u32 %v150, 2147483648
    %v163 = vor.u32 1.1754944e-38, %v162
    %v164 = vsel %vm161, %v163, %v159
    %v165 = vmul.f32 %v143, %v164
    %v167 = vsel %vm133, %v165, 0
    %169 = vmatpush.msra.mxu0 0.0
    %170 = vmatpush.msra.mxu0 0.0
    %171 = vmatpush.msra.mxu0 0.0
    %172 = vmatpush.msra.mxu0 0.0
    %173 = vmatpush.msra.mxu0 0.0
    %174 = vmatpush.msra.mxu0 0.0
    %175 = vmatpush.msra.mxu0 0.0
    %176 = vmatpush.msra.mxu0 0.0
    %177 = vmatpush.msra.mxu0 0.0
    %178 = vmatpush.msra.mxu0 0.0
    %179 = vmatpush.msra.mxu0 0.0
    %180 = vmatpush.msra.mxu0 0.0
    %181 = vmatpush.msra.mxu0 0.0
    %182 = vmatpush.msra.mxu0 0.0
    %183 = vmatpush.msra.mxu0 0.0
    %184 = vmatpush.msra.mxu0 %v95
    %185 = vmatmul.f32.gmra.mxu0 %v167
    %v186 = vpop.f32.mrf.mxu0
    %v187 = vadd.f32 0.0, %v186
    %188 = vdwg.mxu0
    %189 = vrot.lane.b32.xlu0 %v75, 112
    %v190 = vpop.permute.xlu0 %189
    %191 = vrot.lane.b32.xlu0 %v75, 48
    %v192 = vpop.permute.xlu0 %191
    %v193 = vsel %vm100, %v190, 0
    %v195 = vsel %vm100, %v192, 0
    %197 = vmatpush.xpose.msra.mxu0 0.0
    %198 = vmatpush.xpose.msra.mxu0 0.0
    %199 = vmatpush.xpose.msra.mxu0 0.0
    %200 = vmatpush.xpose.msra.mxu0 0.0
    %201 = vmatpush.xpose.msra.mxu0 0.0
    %202 = vmatpush.xpose.msra.mxu0 0.0
    %203 = vmatpush.xpose.msra.mxu0 0.0
    %204 = vmatpush.xpose.msra.mxu0 0.0
    %205 = vmatpush.xpose.msra.mxu0 0.0
    %206 = vmatpush.xpose.msra.mxu0 0.0
    %207 = vmatpush.xpose.msra.mxu0 0.0
    %208 = vmatpush.xpose.msra.mxu0 0.0
    %209 = vmatpush.xpose.msra.mxu0 0.0
    %210 = vmatpush.xpose.msra.mxu0 0.0
    %211 = vmatpush.xpose.msra.mxu0 0.0
    %212 = vmatpush.xpose.msra.mxu0 %v195
    %213 = vmatmul.f32.gmra.mxu0 %v193
    %v214 = vpop.f32.mrf.mxu0
    %v215 = vadd.f32 0.0, %v214
    %216 = vdwg.mxu0
    %v217 = vmul.f32 %v215, %v131
    %v218 = vsel %vm133, %v217, -inf
    %v219 = vrot.slane %v218, 4
    %v220 = vmax.f32 %v218, %v219
    %v221 = vrot.slane %v220, 2
    %v222 = vmax.f32 %v220, %v221
    %v223 = vrot.slane %v222, 1
    %v224 = vmax.f32 %v222, %v223
    %v225 = vsub.f32 %v217, %v224
    %v226 = vmul.f32 %v225, 1.442695
    %v227 = vpow.pop %v226
    %v228 = vsel %vm133, %v227, 0.0
    %v229 = vrot.slane %v228, 4
    %v230 = vadd.f32 %v228, %v229
    %v231 = vrot.slane %v230, 2
    %v232 = vadd.f32 %v230, %v231
    %v233 = vrot.slane %v232, 1
    %v234 = vadd.f32 %v232, %v233
    %v235 = vrcp.pop %v234
    %v236 = vmul.f32 %v234, %v235
    %v237 = vsub.f32 1.0, %v236
    %v238 = vmul.f32 %v235, %v237
    %v239 = vadd.f32 %v235, %v238
    %vm240 = vweird.f32 %v234
    %vm241 = vweird.f32 %v235
    %vm242 = vmor %vm240, %vm241
    %v243 = vsel %vm242, %v235, %v239
    %v244 = vand.u32 2147483647, %v234
    %vm245 = vcmp.eq.f32.partialorder %v244, 8.507059e+37
    %v246 = vand.u32 %v234, 2147483648
    %v247 = vor.u32 1.1754944e-38, %v246
    %v248 = vsel %vm245, %v247, %v243
    %v249 = vmul.f32 %v227, %v248
    %251 = vrot.lane.b32.xlu0 %v95, 112
    %v252 = vpop.permute.xlu0 %251
    %v255 = vsel %vm133, %v249, 0
    %257 = vmatpush.msra.mxu0 0.0
    %258 = vmatpush.msra.mxu0 0.0
    %259 = vmatpush.msra.mxu0 0.0
    %260 = vmatpush.msra.mxu0 0.0
    %261 = vmatpush.msra.mxu0 0.0
    %262 = vmatpush.msra.mxu0 0.0
    %263 = vmatpush.msra.mxu0 0.0
    %264 = vmatpush.msra.mxu0 0.0
    %265 = vmatpush.msra.mxu0 0.0
    %266 = vmatpush.msra.mxu0 0.0
    %267 = vmatpush.msra.mxu0 0.0
    %268 = vmatpush.msra.mxu0 0.0
    %269 = vmatpush.msra.mxu0 0.0
    %270 = vmatpush.msra.mxu0 0.0
    %271 = vmatpush.msra.mxu0 0.0
    %272 = vmatpush.msra.mxu0 %v252
    %273 = vmatmul.f32.gmra.mxu0 %v255
    %v274 = vpop.f32.mrf.mxu0
    %v275 = vadd.f32 0.0, %v274
    %276 = vdwg.mxu0
    %277 = vrot.lane.b32.xlu0 %v75, 96
    %v278 = vpop.permute.xlu0 %277
    %279 = vrot.lane.b32.xlu0 %v75, 32
    %v280 = vpop.permute.xlu0 %279
    %v281 = vsel %vm100, %v278, 0
    %v283 = vsel %vm100, %v280, 0
    %285 = vmatpush.xpose.msra.mxu0 0.0
    %286 = vmatpush.xpose.msra.mxu0 0.0
    %287 = vmatpush.xpose.msra.mxu0 0.0
    %288 = vmatpush.xpose.msra.mxu0 0.0
    %289 = vmatpush.xpose.msra.mxu0 0.0
    %290 = vmatpush.xpose.msra.mxu0 0.0
    %291 = vmatpush.xpose.msra.mxu0 0.0
    %292 = vmatpush.xpose.msra.mxu0 0.0
    %293 = vmatpush.xpose.msra.mxu0 0.0
    %294 = vmatpush.xpose.msra.mxu0 0.0
    %295 = vmatpush.xpose.msra.mxu0 0.0
    %296 = vmatpush.xpose.msra.mxu0 0.0
    %297 = vmatpush.xpose.msra.mxu0 0.0
    %298 = vmatpush.xpose.msra.mxu0 0.0
    %299 = vmatpush.xpose.msra.mxu0 0.0
    %300 = vmatpush.xpose.msra.mxu0 %v283
    %301 = vmatmul.f32.gmra.mxu0 %v281
    %v302 = vpop.f32.mrf.mxu0
    %v303 = vadd.f32 0.0, %v302
    %304 = vdwg.mxu0
    %v305 = vmul.f32 %v303, %v131
    %v306 = vsel %vm133, %v305, -inf
    %v307 = vrot.slane %v306, 4
    %v308 = vmax.f32 %v306, %v307
    %v309 = vrot.slane %v308, 2
    %v310 = vmax.f32 %v308, %v309
    %v311 = vrot.slane %v310, 1
    %v312 = vmax.f32 %v310, %v311
    %v313 = vsub.f32 %v305, %v312
    %v314 = vmul.f32 %v313, 1.442695
    %v315 = vpow.pop %v314
    %v316 = vsel %vm133, %v315, 0.0
    %v317 = vrot.slane %v316, 4
    %v318 = vadd.f32 %v316, %v317
    %v319 = vrot.slane %v318, 2
    %v320 = vadd.f32 %v318, %v319
    %v321 = vrot.slane %v320, 1
    %v322 = vadd.f32 %v320, %v321
    %v323 = vrcp.pop %v322
    %v324 = vmul.f32 %v322, %v323
    %v325 = vsub.f32 1.0, %v324
    %v326 = vmul.f32 %v323, %v325
    %v327 = vadd.f32 %v323, %v326
    %vm328 = vweird.f32 %v322
    %vm329 = vweird.f32 %v323
    %vm330 = vmor %vm328, %vm329
    %v331 = vsel %vm330, %v323, %v327
    %v332 = vand.u32 2147483647, %v322
    %vm333 = vcmp.eq.f32.partialorder %v332, 8.507059e+37
    %v334 = vand.u32 %v322, 2147483648
    %v335 = vor.u32 1.1754944e-38, %v334
    %v336 = vsel %vm333, %v335, %v331
    %v337 = vmul.f32 %v315, %v336
    %338 = vrot.lane.b32.xlu0 %v95, 96
    %v339 = vpop.permute.xlu0 %338
    %v342 = vsel %vm133, %v337, 0
    %344 = vmatpush.msra.mxu0 0.0
    %345 = vmatpush.msra.mxu0 0.0
    %346 = vmatpush.msra.mxu0 0.0
    %347 = vmatpush.msra.mxu0 0.0
    %348 = vmatpush.msra.mxu0 0.0
    %349 = vmatpush.msra.mxu0 0.0
    %350 = vmatpush.msra.mxu0 0.0
    %351 = vmatpush.msra.mxu0 0.0
    %352 = vmatpush.msra.mxu0 0.0
    %353 = vmatpush.msra.mxu0 0.0
    %354 = vmatpush.msra.mxu0 0.0
    %355 = vmatpush.msra.mxu0 0.0
    %356 = vmatpush.msra.mxu0 0.0
    %357 = vmatpush.msra.mxu0 0.0
    %358 = vmatpush.msra.mxu0 0.0
    %359 = vmatpush.msra.mxu0 %v339
    %360 = vmatmul.f32.gmra.mxu0 %v342
    %v361 = vpop.f32.mrf.mxu0
    %v362 = vadd.f32 0.0, %v361
    %363 = vdwg.mxu0
    %364 = vrot.lane.b32.xlu0 %v75, 80
    %v365 = vpop.permute.xlu0 %364
    %366 = vrot.lane.b32.xlu0 %v75, 16
    %v367 = vpop.permute.xlu0 %366
    %v368 = vsel %vm100, %v365, 0
    %v370 = vsel %vm100, %v367, 0
    %372 = vmatpush.xpose.msra.mxu0 0.0
    %373 = vmatpush.xpose.msra.mxu0 0.0
    %374 = vmatpush.xpose.msra.mxu0 0.0
    %375 = vmatpush.xpose.msra.mxu0 0.0
    %376 = vmatpush.xpose.msra.mxu0 0.0
    %377 = vmatpush.xpose.msra.mxu0 0.0
    %378 = vmatpush.xpose.msra.mxu0 0.0
    %379 = vmatpush.xpose.msra.mxu0 0.0
    %380 = vmatpush.xpose.msra.mxu0 0.0
    %381 = vmatpush.xpose.msra.mxu0 0.0
    %382 = vmatpush.xpose.msra.mxu0 0.0
    %383 = vmatpush.xpose.msra.mxu0 0.0
    %384 = vmatpush.xpose.msra.mxu0 0.0
    %385 = vmatpush.xpose.msra.mxu0 0.0
    %386 = vmatpush.xpose.msra.mxu0 0.0
    %387 = vmatpush.xpose.msra.mxu0 %v370
    %388 = vmatmul.f32.gmra.mxu0 %v368
    %v389 = vpop.f32.mrf.mxu0
    %v390 = vadd.f32 0.0, %v389
    %391 = vdwg.mxu0
    %v392 = vmul.f32 %v390, %v131
    %v393 = vsel %vm133, %v392, -inf
    %v394 = vrot.slane %v393, 4
    %v395 = vmax.f32 %v393, %v394
    %v396 = vrot.slane %v395, 2
    %v397 = vmax.f32 %v395, %v396
    %v398 = vrot.slane %v397, 1
    %v399 = vmax.f32 %v397, %v398
    %v400 = vsub.f32 %v392, %v399
    %v401 = vmul.f32 %v400, 1.442695
    %v402 = vpow.pop %v401
    %v403 = vsel %vm133, %v402, 0.0
    %v404 = vrot.slane %v403, 4
    %v405 = vadd.f32 %v403, %v404
    %v406 = vrot.slane %v405, 2
    %v407 = vadd.f32 %v405, %v406
    %v408 = vrot.slane %v407, 1
    %v409 = vadd.f32 %v407, %v408
    %v410 = vrcp.pop %v409
    %v411 = vmul.f32 %v409, %v410
    %v412 = vsub.f32 1.0, %v411
    %v413 = vmul.f32 %v410, %v412
    %v414 = vadd.f32 %v410, %v413
    %vm415 = vweird.f32 %v409
    %vm416 = vweird.f32 %v410
    %vm417 = vmor %vm415, %vm416
    %v418 = vsel %vm417, %v410, %v414
    %v419 = vand.u32 2147483647, %v409
    %vm420 = vcmp.eq.f32.partialorder %v419, 8.507059e+37
    %v421 = vand.u32 %v409, 2147483648
    %v422 = vor.u32 1.1754944e-38, %v421
    %v423 = vsel %vm420, %v422, %v418
    %v424 = vmul.f32 %v402, %v423
    %425 = vrot.lane.b32.xlu0 %v95, 80
    %v426 = vpop.permute.xlu0 %425
    %v429 = vsel %vm133, %v424, 0
    %431 = vmatpush.msra.mxu0 0.0
    %432 = vmatpush.msra.mxu0 0.0
    %433 = vmatpush.msra.mxu0 0.0
    %434 = vmatpush.msra.mxu0 0.0
    %435 = vmatpush.msra.mxu0 0.0
    %436 = vmatpush.msra.mxu0 0.0
    %437 = vmatpush.msra.mxu0 0.0
    %438 = vmatpush.msra.mxu0 0.0
    %439 = vmatpush.msra.mxu0 0.0
    %440 = vmatpush.msra.mxu0 0.0
    %441 = vmatpush.msra.mxu0 0.0
    %442 = vmatpush.msra.mxu0 0.0
    %443 = vmatpush.msra.mxu0 0.0
    %444 = vmatpush.msra.mxu0 0.0
    %445 = vmatpush.msra.mxu0 0.0
    %446 = vmatpush.msra.mxu0 %v426
    %447 = vmatmul.f32.gmra.mxu0 %v429
    %v448 = vpop.f32.mrf.mxu0
    %v449 = vadd.f32 0.0, %v448
    %450 = vdwg.mxu0
    %451 = vrot.lane.b32.xlu0 %v249, 8
    %v452 = vpop.permute.xlu0 %451
    %454 = vrot.lane.b32.xlu0 %v337, 16
    %v455 = vpop.permute.xlu0 %454
    %457 = vrot.lane.b32.xlu0 %v424, 24
    %v458 = vpop.permute.xlu0 %457
    %v460 = vsel %vm133, %v165, %v452
    %v461 = vsel %vm100, %v460, %v455
    %vm462 = vcmask 195584
    %v463 = vsel %vm462, %v461, %v458
    %464 = vst.msk [vmem:[%s13] sm:$0xff] %vm53, %v463
    %466 = vrot.lane.b32.xlu0 %v275, 16
    %v467 = vpop.permute.xlu0 %466
    %470 = vrot.lane.b32.xlu0 %v362, 32
    %v471 = vpop.permute.xlu0 %470
    %474 = vrot.lane.b32.xlu0 %v449, 48
    %v475 = vpop.permute.xlu0 %474
    %v477 = vsel %vm100, %v187, %v467
    %v478 = vsel %vm53, %v477, %v471
    %vm479 = vcmask 392192
    %v480 = vsel %vm479, %v478, %v475
    %v481 = vld [vmem:[%s2] sm:$0xff]
    %v482 = vld [vmem:[%s2 + $0x8] sm:$0xff]
    %v483 = vld [vmem:[%s2 + $0x10] sm:$0xff]
    %v484 = vld [vmem:[%s2 + $0x18] sm:$0xff]
    %v485 = vld [vmem:[%s2 + $0x20] sm:$0xff]
    %v486 = vld [vmem:[%s2 + $0x28] sm:$0xff]
    %v487 = vld [vmem:[%s2 + $0x30] sm:$0xff]
    %v488 = vld [vmem:[%s2 + $0x38] sm:$0xff]
    %v489 = vld [vmem:[%s3] sm:$0x1]
    %v491 = vperm.slane %v489, 0
    %vm493 = vcmask 523264
    %v495 = vsel %vm493, %v480, 0
    %497 = vmatpush.msra.mxu0 0.0
    %498 = vmatpush.msra.mxu0 0.0
    %499 = vmatpush.msra.mxu0 0.0
    %500 = vmatpush.msra.mxu0 0.0
    %501 = vmatpush.msra.mxu0 0.0
    %502 = vmatpush.msra.mxu0 0.0
    %503 = vmatpush.msra.mxu0 0.0
    %504 = vmatpush.msra.mxu0 0.0
    %505 = vmatpush.msra.mxu0 %v488
    %506 = vmatpush.msra.mxu0 %v487
    %507 = vmatpush.msra.mxu0 %v486
    %508 = vmatpush.msra.mxu0 %v485
    %509 = vmatpush.msra.mxu0 %v484
    %510 = vmatpush.msra.mxu0 %v483
    %511 = vmatpush.msra.mxu0 %v482
    %512 = vmatpush.msra.mxu0 %v481
    %513 = vmatmul.f32.gmra.mxu0 %v495
    %v514 = vpop.f32.mrf.mxu0
    %v515 = vadd.f32 %v491, %v514
    %516 = vdwg.mxu0
    %v517 = vadd.f32 %v515, %v44
    %v518 = vsel %vm53, %v517, 0.0
    %519 = vadd.xlane.f32.xlu0 %v518
    %v520 = vpop.xlane.xlu0 %519
    %v521 = vrcp.pop 32.0
    %v522 = vmul.f32 32.0, %v521
    %v523 = vsub.f32 1.0, %v522
    %v524 = vmul.f32 %v521, %v523
    %v525 = vadd.f32 %v521, %v524
    %vm526 = vweird.f32 %v521
    %v527 = vsel %vm526, %v521, %v525
    %v528 = vmul.f32 %v520, %v527
    %v529 = vsub.f32 %v517, %v528
    %v530 = vmul.f32 %v529, %v529
    %v531 = vsel %vm53, %v530, 0.0
    %532 = vadd.xlane.f32.xlu0 %v531
    %v533 = vpop.xlane.xlu0 %532
    %v534 = vmul.f32 %v533, %v527
    %v535 = vadd.f32 %v534, 1e-05
    %v536 = vrsqrt.pop %v535
    %v537 = vmul.f32 %v536, %v535
    %v538 = vmul.f32 %v537, %v536
    %v539 = vmul.f32 0.5, %v538
    %v540 = vsub.f32 1.5, %v539
    %v541 = vmul.f32 %v536, %v540
    %vm542 = vweird.f32 %v535
    %vm543 = vweird.f32 %v536
    %vm544 = vmor %vm542, %vm543
    %v545 = vsel %vm544, %v536, %v541
    %v546 = vmul.f32 %v529, %v545
    %v547 = vld [vmem:[%s4] sm:$0x1]
    %v549 = vperm.slane %v547, 0
    %v551 = vmul.f32 %v546, %v549
    %v552 = vld [vmem:[%s5] sm:$0x1]
    %v554 = vperm.slane %v552, 0
    %v556 = vadd.f32 %v551, %v554
    %v557 = vld [vmem:[%s6] sm:$0xff]
    %v558 = vld [vmem:[%s6 + $0x8] sm:$0xff]
    %v559 = vld [vmem:[%s6 + $0x10] sm:$0xff]
    %v560 = vld [vmem:[%s6 + $0x18] sm:$0xff]
    %v561 = vld [vmem:[%s7] sm:$0x1]
    %v563 = vperm.slane %v561, 0
    %v566 = vsel %vm53, %v556, 0
    %568 = vmatpush.msra.mxu0 0.0
    %569 = vmatpush.msra.mxu0 0.0
    %570 = vmatpush.msra.mxu0 0.0
    %571 = vmatpush.msra.mxu0 0.0
    %572 = vmatpush.msra.mxu0 0.0
    %573 = vmatpush.msra.mxu0 0.0
    %574 = vmatpush.msra.mxu0 0.0
    %575 = vmatpush.msra.mxu0 0.0
    %576 = vmatpush.msra.mxu0 0.0
    %577 = vmatpush.msra.mxu0 0.0
    %578 = vmatpush.msra.mxu0 0.0
    %579 = vmatpush.msra.mxu0 0.0
    %580 = vmatpush.msra.mxu0 %v560
    %581 = vmatpush.msra.mxu0 %v559
    %582 = vmatpush.msra.mxu0 %v558
    %583 = vmatpush.msra.mxu0 %v557
    %584 = vmatmul.f32.gmra.mxu0 %v566
    %v585 = vpop.f32.mrf.mxu0
    %v586 = vadd.f32 %v563, %v585
    %587 = vdwg.mxu0
    %v588 = vmax.f32 %v586, 0.0
    %v589 = vld [vmem:[%s8] sm:$0xff]
    %v590 = vld [vmem:[%s8 + $0x8] sm:$0xff]
    %v591 = vld [vmem:[%s8 + $0x10] sm:$0xff]
    %v592 = vld [vmem:[%s8 + $0x18] sm:$0xff]
    %v593 = vld [vmem:[%s8 + $0x20] sm:$0xff]
    %v594 = vld [vmem:[%s8 + $0x28] sm:$0xff]
    %v595 = vld [vmem:[%s8 + $0x30] sm:$0xff]
    %v596 = vld [vmem:[%s8 + $0x38] sm:$0xff]
    %v597 = vld [vmem:[%s9] sm:$0x1]
    %v599 = vperm.slane %v597, 0
    %v602 = vsel %vm493, %v588, 0
    %604 = vmatpush.msra.mxu0 0.0
    %605 = vmatpush.msra.mxu0 0.0
    %606 = vmatpush.msra.mxu0 0.0
    %607 = vmatpush.msra.mxu0 0.0
    %608 = vmatpush.msra.mxu0 0.0
    %609 = vmatpush.msra.mxu0 0.0
    %610 = vmatpush.msra.mxu0 0.0
    %611 = vmatpush.msra.mxu0 0.0
    %612 = vmatpush.msra.mxu0 %v596
    %613 = vmatpush.msra.mxu0 %v595
    %614 = vmatpush.msra.mxu0 %v594
    %615 = vmatpush.msra.mxu0 %v593
    %616 = vmatpush.msra.mxu0 %v592
    %617 = vmatpush.msra.mxu0 %v591
    %618 = vmatpush.msra.mxu0 %v590
    %619 = vmatpush.msra.mxu0 %v589
    %620 = vmatmul.f32.gmra.mxu0 %v602
    %v621 = vpop.f32.mrf.mxu0
    %v622 = vadd.f32 %v599, %v621
    %623 = vdwg.mxu0
    %v624 = vadd.f32 %v622, %v556
    %v625 = vsel %vm53, %v624, 0.0
    %626 = vadd.xlane.f32.xlu0 %v625
    %v627 = vpop.xlane.xlu0 %626
    %v628 = vmul.f32 %v627, %v527
    %v629 = vsub.f32 %v624, %v628
    %v630 = vmul.f32 %v629, %v629
    %v631 = vsel %vm53, %v630, 0.0
    %632 = vadd.xlane.f32.xlu0 %v631
    %v633 = vpop.xlane.xlu0 %632
    %v634 = vmul.f32 %v633, %v527
    %v635 = vadd.f32 %v634, 1e-05
    %v636 = vrsqrt.pop %v635
    %v637 = vmul.f32 %v636, %v635
    %v638 = vmul.f32 %v637, %v636
    %v639 = vmul.f32 0.5, %v638
    %v640 = vsub.f32 1.5, %v639
    %v641 = vmul.f32 %v636, %v640
    %vm642 = vweird.f32 %v635
    %vm643 = vweird.f32 %v636
    %vm644 = vmor %vm642, %vm643
    %v645 = vsel %vm644, %v636, %v641
    %v646 = vmul.f32 %v629, %v645
    %v647 = vld [vmem:[%s10] sm:$0x1]
    %v649 = vperm.slane %v647, 0
    %v651 = vmul.f32 %v646, %v649
    %v652 = vld [vmem:[%s11] sm:$0x1]
    %v654 = vperm.slane %v652, 0
    %v656 = vadd.f32 %v651, %v654
    %657 = vst.msk [vmem:[#allocation2] sm:$0xff] %vm53, %v656
    // Predicated region
    $region50: #{self_attention_encoder_layer.1} parent=1 // pred_check
      _
    $region51: #{self_attention_encoder_layer.1} parent=1 // pred_check_branch
      %659 = sbr.rel (0) target = $region53
    $region52: #{self_attention_encoder_layer.1} parent=1 // pred_region
      %661 = vsyncadd [#allocation3], 0
      %s663 = sshll.u32 [#allocation2], 4
      %s664 = int_to_ptr.vmem [resolvable:$true] %s663
      %s665 = sshll.u32 %s12, 4
      %s666 = int_to_ptr.hbm [resolvable:$true] %s665
      %668 = dma.vmem_to_hbm [thread:$0]  %s664, 128, %s666, [#allocation3]
    $region53: #{self_attention_encoder_layer.1} parent=1 // pred_fallthru
      _
    // Predicated region
    $region54: #{self_attention_encoder_layer.1} parent=1 // pred_check
      _
    $region55: #{self_attention_encoder_layer.1} parent=1 // pred_check_branch
      %670 = sbr.rel (0) target = $region57
    $region56: #{self_attention_encoder_layer.1} parent=1 // pred_region
      _
    $region57: #{self_attention_encoder_layer.1} parent=1 // pred_fallthru
      _
    // Predicated region
    $region58: #{self_attention_encoder_layer.1} parent=1 // pred_check
      _
    $region59: #{self_attention_encoder_layer.1} parent=1 // pred_check_branch
      %672 = sbr.rel (0) target = $region61
    $region60: #{self_attention_encoder_layer.1} parent=1 // pred_region
      %674 = dma.done [#allocation3], 128
    $region61: #{self_attention_encoder_layer.1} parent=1 // pred_fallthru
      _
    // Predicated region
    $region62: #{self_attention_encoder_layer.1} parent=1 // pred_check
      _
    $region63: #{self_attention_encoder_layer.1} parent=1 // pred_check_branch
      %676 = sbr.rel (0) target = $region65
    $region64: #{self_attention_encoder_layer.1} parent=1 // pred_region
      _
    $region65: #{self_attention_encoder_layer.1} parent=1 // pred_fallthru
      _
    %677 = vsyncpa [#allocation3], 1

</llo_original>
